<compile_context>
chip_gen: v6e
topology: v6e:2x2x1
jax: 0.10.0
libtpu: 0.0.40
codegen_flags: <defaults>
</compile_context>

<pallas_src>
import math
from functools import partial

import jax
import jax.numpy as jnp
from jax.experimental import pallas as pl
from jax.experimental.pallas import tpu as pltpu

_LANE = 128      # lane width: hidden feature dims padded to a multiple of this
_SUBLANE = 8     # f32 sublane count: batch tiles / input dim padded to multiples of this


def _round_up(n, m):
    return (n + m - 1) // m * m


def _cdiv(a, b):
    return (a + b - 1) // b


def _leaky_relu(x, negative_slope=0.01):
    # max(x, a*x) == leaky_relu for 0 < a < 1: one vmul+vmax instead of cmp+select.
    return jnp.maximum(x, negative_slope * x)


def qnetwork_kernel(x_ref,
                    w1_ref, b1_ref,
                    w2_ref, b2_ref,
                    w3_ref, b3_ref,
                    w4_ref, b4_ref,
                    out_ref):
    """Fused 4-layer MLP on one (batch_tile, in_dim) block of states.

    Hidden dims are zero-padded to 128 lanes (exact: zero rows/cols contribute
    zero, zero biases, and leaky_relu(0) == 0).  The input dim and the output
    (action) dim are left unpadded.
    """
    x = x_ref[...]

    # fc1 + leaky_relu   (dropout1 is identity at inference)
    h = jnp.dot(x, w1_ref[...], preferred_element_type=jnp.float32) + b1_ref[...]
    h = _leaky_relu(h)

    # fc2 + leaky_relu   (dropout2 is identity at inference)
    h = jnp.dot(h, w2_ref[...], preferred_element_type=jnp.float32) + b2_ref[...]
    h = _leaky_relu(h)

    # fc3 + leaky_relu
    h = jnp.dot(h, w3_ref[...], preferred_element_type=jnp.float32) + b3_ref[...]
    h = _leaky_relu(h)

    # fc4 (no activation); narrow (out_dim-wide) store is accepted — total
    # output bytes dominate here, not lane density.
    q = jnp.dot(h, w4_ref[...], preferred_element_type=jnp.float32) + b4_ref[...]
    out_ref[...] = q.astype(out_ref.dtype)


def pad_params(params):
    """Pad parameters for the kernel (done once, off the forward path).

      * w1 input dim  -> multiple of 8 (f32 sublane alignment), NOT 128.
      * hidden dims   -> multiple of 128 lanes (zero padding is exact).
      * w4 / b4 output dim is left UNPADDED so the Q-value store is narrow.
    """
    in_dim, hidden = params["w1"].shape
    hidden2 = params["w3"].shape[1]
    out_dim = params["w4"].shape[1]

    in_p = _round_up(in_dim, _SUBLANE)
    h_p = _round_up(hidden, _LANE)
    h2_p = _round_up(hidden2, _LANE)

    def pad2(a, r, c):
        return jnp.zeros((r, c), a.dtype).at[:a.shape[0], :a.shape[1]].set(a)

    return {
        "w1": pad2(params["w1"], in_p, h_p),   "b1": pad2(params["b1"], 1, h_p),
        "w2": pad2(params["w2"], h_p, h_p),    "b2": pad2(params["b2"], 1, h_p),
        "w3": pad2(params["w3"], h_p, h2_p),   "b3": pad2(params["b3"], 1, h2_p),
        "w4": pad2(params["w4"], h2_p, out_dim), "b4": pad2(params["b4"], 1, out_dim),
    }


def _default_min_steps():
    """v7x has 2 TensorCores/chip: use >=2 grid steps so the 'parallel' batch
    axis shards across both cores.  Single step elsewhere (grid is serial)."""
    try:
        kind = jax.devices()[0].device_kind.lower()
    except Exception:
        return 1
    return 2 if "v7" in kind else 1


def _choose_tiling(batch, batch_tile, min_steps):
    """Batch tiling: pad batch only to a multiple of 8, never to a full tile."""
    padded8 = _round_up(max(batch, 1), _SUBLANE)
    steps = _cdiv(padded8, batch_tile)
    # Only split for multi-core when each core gets a meaningful slab of rows.
    if min_steps > 1 and padded8 >= min_steps * 128:
        steps = max(steps, min_steps)
    tb = _round_up(_cdiv(padded8, steps), _SUBLANE)
    return tb, steps, tb * steps


@partial(jax.jit, static_argnames=("batch_tile", "min_steps"))
def _qnetwork_forward_jit(x, pp, batch_tile, min_steps):
    batch, in_dim = x.shape
    in_p = pp["w1"].shape[0]
    out_dim = pp["w4"].shape[1]

    tb, steps, padded_batch = _choose_tiling(batch, batch_tile, min_steps)

    # Only sublane row padding (+ tiny col pad if in_dim % 8 != 0); this fuses
    # into the surrounding jit, no separate host-side materialization.
    x_pad = jnp.zeros((padded_batch, in_p), x.dtype).at[:batch, :in_dim].set(x)

    # Weights/biases: full blocks with constant index_map -> VMEM-resident
    # across the whole batch grid (DMA'd once, not per grid step).
    def resident(a):
        return pl.BlockSpec(a.shape, lambda i: (0, 0))

    operands = (x_pad,
                pp["w1"], pp["b1"],
                pp["w2"], pp["b2"],
                pp["w3"], pp["b3"],
                pp["w4"], pp["b4"])

    in_specs = [pl.BlockSpec((tb, in_p), lambda i: (i, 0))]
    in_specs += [resident(a) for a in operands[1:]]

    out = pl.pallas_call(
        qnetwork_kernel,
        out_shape=jax.ShapeDtypeStruct((padded_batch, out_dim), jnp.float32),
        grid=(steps,),
        in_specs=in_specs,
        out_specs=pl.BlockSpec((tb, out_dim), lambda i: (i, 0)),
        compiler_params=pltpu.CompilerParams(
            dimension_semantics=("parallel",)),   # shards batch across TCs on v7x
    )(*operands)

    return out[:batch]   # drop the <=7 padded rows; fuses under jit


def qnetwork_forward(x, padded_params, batch_tile=1024, min_steps=None):
    """Run the fused QNetwork forward pass.

    x: (batch, rozmiar_wejścia) or (rozmiar_wejścia,) float32
    padded_params: output of pad_params()
    """
    if x.ndim == 1:
        x = x[None, :]          # mirror the torch `x.unsqueeze(0)` branch
    if min_steps is None:
        min_steps = _default_min_steps()
    return _qnetwork_forward_jit(x, padded_params, int(batch_tile), int(min_steps))


def init_params(key, rozmiar_wejscia, rozmiar_ukryty, rozmiar_wyjscia):
    """Parameter init mirroring the module's __init__.

    kaiming_uniform_ (a=0, gain=sqrt(2) -> bound=sqrt(6/fan_in)) for fc1..fc3,
    xavier_uniform for fc4, PyTorch-default uniform(±1/sqrt(fan_in)) biases.
    Weights are stored already transposed to (in, out) so the kernel computes
    y = x @ W + b.
    """
    keys = jax.random.split(key, 8)
    h2 = rozmiar_ukryty // 2

    def kaiming_uniform(k, fan_in, fan_out):
        bound = math.sqrt(6.0 / fan_in)
        return jax.random.uniform(k, (fan_in, fan_out), jnp.float32, -bound, bound)

    def xavier_uniform(k, fan_in, fan_out):
        bound = math.sqrt(6.0 / (fan_in + fan_out))
        return jax.random.uniform(k, (fan_in, fan_out), jnp.float32, -bound, bound)

    def bias(k, fan_in, fan_out):
        bound = 1.0 / math.sqrt(fan_in)
        return jax.random.uniform(k, (1, fan_out), jnp.float32, -bound, bound)

    return {
        "w1": kaiming_uniform(keys[0], rozmiar_wejscia, rozmiar_ukryty),
        "b1": bias(keys[1], rozmiar_wejscia, rozmiar_ukryty),
        "w2": kaiming_uniform(keys[2], rozmiar_ukryty, rozmiar_ukryty),
        "b2": bias(keys[3], rozmiar_ukryty, rozmiar_ukryty),
        "w3": kaiming_uniform(keys[4], rozmiar_ukryty, h2),
        "b3": bias(keys[5], rozmiar_ukryty, h2),
        "w4": xavier_uniform(keys[6], h2, rozmiar_wyjscia),
        "b4": bias(keys[7], h2, rozmiar_wyjscia),
    }


def qnetwork_ref(x, params):
    """Pure-JAX reference (unpadded params) for correctness checking."""
    if x.ndim == 1:
        x = x[None, :]
    lrelu = lambda v: jnp.where(v >= 0, v, 0.01 * v)
    h = lrelu(x @ params["w1"] + params["b1"])
    h = lrelu(h @ params["w2"] + params["b2"])
    h = lrelu(h @ params["w3"] + params["b3"])
    return h @ params["w4"] + params["b4"]


if __name__ == "__main__":
    # Small shapes consistent with the module: input=16, hidden=32, actions=4.
    rozmiar_wejscia, rozmiar_ukryty, rozmiar_wyjscia = 16, 32, 4

    key = jax.random.PRNGKey(0)
    k_x1, k_x2, k_x3, k_p = jax.random.split(key, 4)
    params = init_params(k_p, rozmiar_wejscia, rozmiar_ukryty, rozmiar_wyjscia)
    pparams = pad_params(params)

    # TODO(synk): training-mode dropout (p=0.2) not implemented; inference semantics only.

    # Case 1: tiny batch (batch=2) -> single (8, 16) block, single grid step.
    x_small = jax.random.normal(k_x1, (2, rozmiar_wejscia), jnp.float32)
    out_small = jax.block_until_ready(qnetwork_forward(x_small, pparams))
    ref_small = qnetwork_ref(x_small, params)
    assert out_small.shape == (2, rozmiar_wyjscia), out_small.shape
    assert jnp.allclose(out_small, ref_small, atol=1e-5, rtol=1e-5), \
        "mismatch vs reference (batch=2)"

    # Case 2: replay-buffer-sized batch (512): single step on v5e/v6e, two
    # balanced 256-row steps on v7x.
    x_big = jax.random.normal(k_x2, (512, rozmiar_wejscia), jnp.float32)
    out_big = jax.block_until_ready(qnetwork_forward(x_big, pparams))
    ref_big = qnetwork_ref(x_big, params)
    assert out_big.shape == (512, rozmiar_wyjscia), out_big.shape
    assert jnp.allclose(out_big, ref_big, atol=1e-4, rtol=1e-4), \
        "mismatch vs reference (batch=512)"

    # Case 3: ragged batch (non-multiple of 8) to exercise minimal row padding.
    x_odd = jax.random.normal(k_x3, (261, rozmiar_wejscia), jnp.float32)
    out_odd = jax.block_until_ready(qnetwork_forward(x_odd, pparams))
    ref_odd = qnetwork_ref(x_odd, params)
    assert out_odd.shape == (261, rozmiar_wyjscia), out_odd.shape
    assert jnp.allclose(out_odd, ref_odd, atol=1e-4, rtol=1e-4), \
        "mismatch vs reference (batch=261)"

    print("KERNEL_OK")
</pallas_src>

<mosaic_0001>
module attributes {stable_mosaic.version = 11 : i64} {
  func.func @qnetwork_kernel(%arg0: i32, %arg1: memref<8x16xf32, #tpu.memory_space<vmem>>, %arg2: memref<16x128xf32, #tpu.memory_space<vmem>>, %arg3: memref<1x128xf32, #tpu.memory_space<vmem>>, %arg4: memref<128x128xf32, #tpu.memory_space<vmem>>, %arg5: memref<1x128xf32, #tpu.memory_space<vmem>>, %arg6: memref<128x128xf32, #tpu.memory_space<vmem>>, %arg7: memref<1x128xf32, #tpu.memory_space<vmem>>, %arg8: memref<128x4xf32, #tpu.memory_space<vmem>>, %arg9: memref<1x4xf32, #tpu.memory_space<vmem>>, %arg10: memref<8x4xf32, #tpu.memory_space<vmem>>) attributes {dimension_semantics = [#tpu.dimension_semantics<parallel>], iteration_bounds = array<i64: 1>, scalar_prefetch = 0 : i64, scratch_operands = 0 : i64, tpu.core_type = #tpu.core_type<tc>, window_params = [{transform_indices = @transform_0, window_bounds = array<i64: 8, 16>}, {pipeline_mode = #tpu.pipeline_mode<synchronous>, transform_indices = @transform_1, window_bounds = array<i64: 16, 128>}, {pipeline_mode = #tpu.pipeline_mode<synchronous>, transform_indices = @transform_2, window_bounds = array<i64: 1, 128>}, {pipeline_mode = #tpu.pipeline_mode<synchronous>, transform_indices = @transform_3, window_bounds = array<i64: 128, 128>}, {pipeline_mode = #tpu.pipeline_mode<synchronous>, transform_indices = @transform_4, window_bounds = array<i64: 1, 128>}, {pipeline_mode = #tpu.pipeline_mode<synchronous>, transform_indices = @transform_5, window_bounds = array<i64: 128, 128>}, {pipeline_mode = #tpu.pipeline_mode<synchronous>, transform_indices = @transform_6, window_bounds = array<i64: 1, 128>}, {pipeline_mode = #tpu.pipeline_mode<synchronous>, transform_indices = @transform_7, window_bounds = array<i64: 128, 4>}, {pipeline_mode = #tpu.pipeline_mode<synchronous>, transform_indices = @transform_8, window_bounds = array<i64: 1, 4>}, {transform_indices = @transform_9, window_bounds = array<i64: 8, 4>}]} {
    %c0 = arith.constant 0 : index
    %c0_0 = arith.constant 0 : index
    %0 = vector.load %arg1[%c0, %c0_0] : memref<8x16xf32, #tpu.memory_space<vmem>>, vector<8x16xf32>
    %c0_1 = arith.constant 0 : index
    %c0_2 = arith.constant 0 : index
    %1 = vector.load %arg2[%c0_1, %c0_2] : memref<16x128xf32, #tpu.memory_space<vmem>>, vector<16x128xf32>
    %cst = arith.constant dense<0.000000e+00> : vector<8x128xf32>
    %2 = tpu.matmul %0, %1, %cst {dimension_numbers = #tpu.dot_dimension_numbers<[1], [0], [0], [1], [0, 0, 1, 1], [], []>} : vector<8x16xf32>, vector<16x128xf32>, vector<8x128xf32> -> vector<8x128xf32>
    %c0_3 = arith.constant 0 : index
    %c0_4 = arith.constant 0 : index
    %3 = vector.load %arg3[%c0_3, %c0_4] : memref<1x128xf32, #tpu.memory_space<vmem>>, vector<1x128xf32>
    %4 = vector.broadcast %3 : vector<1x128xf32> to vector<8x128xf32>
    %5 = arith.addf %2, %4 : vector<8x128xf32>
    %cst_5 = arith.constant 0.00999999977 : f32
    %6 = vector.broadcast %cst_5 : f32 to vector<8x128xf32>
    %7 = arith.mulf %6, %5 : vector<8x128xf32>
    %8 = arith.maximumf %5, %7 : vector<8x128xf32>
    %c0_6 = arith.constant 0 : index
    %c0_7 = arith.constant 0 : index
    %9 = vector.load %arg4[%c0_6, %c0_7] : memref<128x128xf32, #tpu.memory_space<vmem>>, vector<128x128xf32>
    %cst_8 = arith.constant dense<0.000000e+00> : vector<8x128xf32>
    %10 = tpu.matmul %8, %9, %cst_8 {dimension_numbers = #tpu.dot_dimension_numbers<[1], [0], [0], [1], [0, 0, 1, 1], [], []>} : vector<8x128xf32>, vector<128x128xf32>, vector<8x128xf32> -> vector<8x128xf32>
    %c0_9 = arith.constant 0 : index
    %c0_10 = arith.constant 0 : index
    %11 = vector.load %arg5[%c0_9, %c0_10] : memref<1x128xf32, #tpu.memory_space<vmem>>, vector<1x128xf32>
    %12 = vector.broadcast %11 : vector<1x128xf32> to vector<8x128xf32>
    %13 = arith.addf %10, %12 : vector<8x128xf32>
    %cst_11 = arith.constant 0.00999999977 : f32
    %14 = vector.broadcast %cst_11 : f32 to vector<8x128xf32>
    %15 = arith.mulf %14, %13 : vector<8x128xf32>
    %16 = arith.maximumf %13, %15 : vector<8x128xf32>
    %c0_12 = arith.constant 0 : index
    %c0_13 = arith.constant 0 : index
    %17 = vector.load %arg6[%c0_12, %c0_13] : memref<128x128xf32, #tpu.memory_space<vmem>>, vector<128x128xf32>
    %cst_14 = arith.constant dense<0.000000e+00> : vector<8x128xf32>
    %18 = tpu.matmul %16, %17, %cst_14 {dimension_numbers = #tpu.dot_dimension_numbers<[1], [0], [0], [1], [0, 0, 1, 1], [], []>} : vector<8x128xf32>, vector<128x128xf32>, vector<8x128xf32> -> vector<8x128xf32>
    %c0_15 = arith.constant 0 : index
    %c0_16 = arith.constant 0 : index
    %19 = vector.load %arg7[%c0_15, %c0_16] : memref<1x128xf32, #tpu.memory_space<vmem>>, vector<1x128xf32>
    %20 = vector.broadcast %19 : vector<1x128xf32> to vector<8x128xf32>
    %21 = arith.addf %18, %20 : vector<8x128xf32>
    %cst_17 = arith.constant 0.00999999977 : f32
    %22 = vector.broadcast %cst_17 : f32 to vector<8x128xf32>
    %23 = arith.mulf %22, %21 : vector<8x128xf32>
    %24 = arith.maximumf %21, %23 : vector<8x128xf32>
    %c0_18 = arith.constant 0 : index
    %c0_19 = arith.constant 0 : index
    %25 = vector.load %arg8[%c0_18, %c0_19] : memref<128x4xf32, #tpu.memory_space<vmem>>, vector<128x4xf32>
    %cst_20 = arith.constant dense<0.000000e+00> : vector<8x4xf32>
    %26 = tpu.matmul %24, %25, %cst_20 {dimension_numbers = #tpu.dot_dimension_numbers<[1], [0], [0], [1], [0, 0, 1, 1], [], []>} : vector<8x128xf32>, vector<128x4xf32>, vector<8x4xf32> -> vector<8x4xf32>
    %c0_21 = arith.constant 0 : index
    %c0_22 = arith.constant 0 : index
    %27 = vector.load %arg9[%c0_21, %c0_22] : memref<1x4xf32, #tpu.memory_space<vmem>>, vector<1x4xf32>
    %28 = vector.broadcast %27 : vector<1x4xf32> to vector<8x4xf32>
    %29 = arith.addf %26, %28 : vector<8x4xf32>
    %c0_23 = arith.constant 0 : index
    %c0_24 = arith.constant 0 : index
    %30 = vector.load %arg10[%c0_23, %c0_24] : memref<8x4xf32, #tpu.memory_space<vmem>>, vector<8x4xf32>
    tpu.vector_store %arg10[%c0_23, %c0_24], %29 {strides = array<i32>} : memref<8x4xf32, #tpu.memory_space<vmem>>, vector<8x4xf32>,
    return
  }
  func.func @transform_0(%arg0: i32) -> (i32, i32) {
    %c0_i32 = arith.constant 0 : i32
    %c0_i32_0 = arith.constant 0 : i32
    return %arg0, %c0_i32 : i32, i32
  }
  func.func @transform_1(%arg0: i32) -> (i32, i32) {
    %c0_i32 = arith.constant 0 : i32
    %c0_i32_0 = arith.constant 0 : i32
    %c0_i32_1 = arith.constant 0 : i32
    return %c0_i32, %c0_i32_0 : i32, i32
  }
  func.func @transform_2(%arg0: i32) -> (i32, i32) {
    %c0_i32 = arith.constant 0 : i32
    %c0_i32_0 = arith.constant 0 : i32
    %c0_i32_1 = arith.constant 0 : i32
    return %c0_i32, %c0_i32_0 : i32, i32
  }
  func.func @transform_3(%arg0: i32) -> (i32, i32) {
    %c0_i32 = arith.constant 0 : i32
    %c0_i32_0 = arith.constant 0 : i32
    %c0_i32_1 = arith.constant 0 : i32
    return %c0_i32, %c0_i32_0 : i32, i32
  }
  func.func @transform_4(%arg0: i32) -> (i32, i32) {
    %c0_i32 = arith.constant 0 : i32
    %c0_i32_0 = arith.constant 0 : i32
    %c0_i32_1 = arith.constant 0 : i32
    return %c0_i32, %c0_i32_0 : i32, i32
  }
  func.func @transform_5(%arg0: i32) -> (i32, i32) {
    %c0_i32 = arith.constant 0 : i32
    %c0_i32_0 = arith.constant 0 : i32
    %c0_i32_1 = arith.constant 0 : i32
    return %c0_i32, %c0_i32_0 : i32, i32
  }
  func.func @transform_6(%arg0: i32) -> (i32, i32) {
    %c0_i32 = arith.constant 0 : i32
    %c0_i32_0 = arith.constant 0 : i32
    %c0_i32_1 = arith.constant 0 : i32
    return %c0_i32, %c0_i32_0 : i32, i32
  }
  func.func @transform_7(%arg0: i32) -> (i32, i32) {
    %c0_i32 = arith.constant 0 : i32
    %c0_i32_0 = arith.constant 0 : i32
    %c0_i32_1 = arith.constant 0 : i32
    return %c0_i32, %c0_i32_0 : i32, i32
  }
  func.func @transform_8(%arg0: i32) -> (i32, i32) {
    %c0_i32 = arith.constant 0 : i32
    %c0_i32_0 = arith.constant 0 : i32
    %c0_i32_1 = arith.constant 0 : i32
    return %c0_i32, %c0_i32_0 : i32, i32
  }
  func.func @transform_9(%arg0: i32) -> (i32, i32) {
    %c0_i32 = arith.constant 0 : i32
    %c0_i32_0 = arith.constant 0 : i32
    return %arg0, %c0_i32 : i32, i32
  }
}

</mosaic_0001>

<llo_original>
// kernel: _qnetwork_forward_jit.1
$region0: #{_qnetwork_forward_jit.1}
  #allocation0 [shape = 'u32[]', space=smem, size = 0x4, offset = 0x4, fixed_abs, tag = 'smem constant byte address 0x4 - core index']
  #allocation1 [shape = 'u32[144,128]{1,0:T(1,128)}', space=vmem, size = 0x12000, scoped, tag = 'internal scratch']
  %s0 = inlined_call_operand.vmem [shape: f32[8,16], index: 0, kind: input, shape index: {}]
  %s1 = inlined_call_operand.vmem [shape: f32[16,128], index: 1, kind: input, shape index: {}]
  %s2 = inlined_call_operand.vmem [shape: f32[1,128], index: 2, kind: input, shape index: {}]
  %s3 = inlined_call_operand.vmem [shape: f32[128,128], index: 3, kind: input, shape index: {}]
  %s4 = inlined_call_operand.vmem [shape: f32[1,128], index: 4, kind: input, shape index: {}]
  %s5 = inlined_call_operand.hbm [shape: f32[128,128], index: 5, kind: input, shape index: {}]
  %s6 = inlined_call_operand.vmem [shape: f32[1,128], index: 6, kind: input, shape index: {}]
  %s7 = inlined_call_operand.vmem [shape: f32[128,4], index: 7, kind: input, shape index: {}]
  %s8 = inlined_call_operand.vmem [shape: f32[1,4], index: 8, kind: input, shape index: {}]
  %s9 = inlined_call_operand.vmem [shape: f32[8,4], index: 9, kind: output, shape index: {}]
  %s10 = sld [smem:[#allocation0]]
  $region50: #{_qnetwork_forward_jit.1} parent=0
    _
  %s12 = ssub.s32 1, %s10
  %s13 = scalar_select 0, %s12, %s10
  $region1: #{_qnetwork_forward_jit.1} parent=0
    #allocation2 [shape = 'u8[65536]{0}', space=vmem, size = 0x10000, scoped, tag = 'input window, operand 5, single buffered']
    #allocation3 [shape = 's32[1]{0}', space=sflag, size = 0x4, scoped, tag = 'scoped memory for _qnetwork_forward_jit.1']
    %14 = vsyncpa [#allocation3], 0
    // Predicated region
    $region2: #{_qnetwork_forward_jit.1} parent=1 // pred_check
      _
    $region3: #{_qnetwork_forward_jit.1} parent=1 // pred_check_branch
      %16 = sbr.rel (0) target = $region5
    $region4: #{_qnetwork_forward_jit.1} parent=1 // pred_region
      _
    $region5: #{_qnetwork_forward_jit.1} parent=1 // pred_fallthru
      _
    // Predicated region
    $region6: #{_qnetwork_forward_jit.1} parent=1 // pred_check
      _
    $region7: #{_qnetwork_forward_jit.1} parent=1 // pred_check_branch
      %18 = sbr.rel (0) target = $region9
    $region8: #{_qnetwork_forward_jit.1} parent=1 // pred_region
      _
    $region9: #{_qnetwork_forward_jit.1} parent=1 // pred_fallthru
      _
    // Predicated region
    $region10: #{_qnetwork_forward_jit.1} parent=1 // pred_check
      _
    $region11: #{_qnetwork_forward_jit.1} parent=1 // pred_check_branch
      %20 = sbr.rel (0) target = $region13
    $region12: #{_qnetwork_forward_jit.1} parent=1 // pred_region
      _
    $region13: #{_qnetwork_forward_jit.1} parent=1 // pred_fallthru
      _
    // Predicated region
    $region14: #{_qnetwork_forward_jit.1} parent=1 // pred_check
      _
    $region15: #{_qnetwork_forward_jit.1} parent=1 // pred_check_branch
      %22 = sbr.rel (0) target = $region17
    $region16: #{_qnetwork_forward_jit.1} parent=1 // pred_region
      _
    $region17: #{_qnetwork_forward_jit.1} parent=1 // pred_fallthru
      _
    // Predicated region
    $region18: #{_qnetwork_forward_jit.1} parent=1 // pred_check
      _
    $region19: #{_qnetwork_forward_jit.1} parent=1 // pred_check_branch
      %24 = sbr.rel (0) target = $region21
    $region20: #{_qnetwork_forward_jit.1} parent=1 // pred_region
      _
    $region21: #{_qnetwork_forward_jit.1} parent=1 // pred_fallthru
      _
    // Predicated region
    $region22: #{_qnetwork_forward_jit.1} parent=1 // pred_check
      _
    $region23: #{_qnetwork_forward_jit.1} parent=1 // pred_check_branch
      %26 = sbr.rel (0) target = $region25
    $region24: #{_qnetwork_forward_jit.1} parent=1 // pred_region
      %s28 = ssub.s32 2048, 2048
      %29 = vsyncadd [#allocation3], %s28
      %s30 = sshll.u32 [#allocation2], 4
      %s31 = int_to_ptr.vmem [resolvable:$true] %s30
      %36 = dma.hbm_to_vmem [thread:$0]  %s5, 2048, %s31, [#allocation3], 128, 128, 8
    $region25: #{_qnetwork_forward_jit.1} parent=1 // pred_fallthru
      _
    // Predicated region
    $region26: #{_qnetwork_forward_jit.1} parent=1 // pred_check
      _
    $region27: #{_qnetwork_forward_jit.1} parent=1 // pred_check_branch
      %38 = sbr.rel (0) target = $region29
    $region28: #{_qnetwork_forward_jit.1} parent=1 // pred_region
      _
    $region29: #{_qnetwork_forward_jit.1} parent=1 // pred_fallthru
      _
    // Predicated region
    $region30: #{_qnetwork_forward_jit.1} parent=1 // pred_check
      _
    $region31: #{_qnetwork_forward_jit.1} parent=1 // pred_check_branch
      %40 = sbr.rel (0) target = $region33
    $region32: #{_qnetwork_forward_jit.1} parent=1 // pred_region
      _
    $region33: #{_qnetwork_forward_jit.1} parent=1 // pred_fallthru
      _
    // Predicated region
    $region34: #{_qnetwork_forward_jit.1} parent=1 // pred_check
      _
    $region35: #{_qnetwork_forward_jit.1} parent=1 // pred_check_branch
      %42 = sbr.rel (0) target = $region37
    $region36: #{_qnetwork_forward_jit.1} parent=1 // pred_region
      _
    $region37: #{_qnetwork_forward_jit.1} parent=1 // pred_fallthru
      _
    // Predicated region
    $region38: #{_qnetwork_forward_jit.1} parent=1 // pred_check
      _
    $region39: #{_qnetwork_forward_jit.1} parent=1 // pred_check_branch
      %44 = sbr.rel (0) target = $region41
    $region40: #{_qnetwork_forward_jit.1} parent=1 // pred_region
      %45 = dma.done [#allocation3], 2048
    $region41: #{_qnetwork_forward_jit.1} parent=1 // pred_fallthru
      _
    %v46 = vld [vmem:[%s0] sm:$0xff]
    %v47 = vld [vmem:[%s1] sm:$0xff]
    %v48 = vld [vmem:[%s1 + $0x8] sm:$0xff]
    %v49 = vld [vmem:[%s2] sm:$0x1]
    %v51 = vlaneseq
    %v52 = vshrl.u32 %v51, 7
    %v53 = vsub.s32 0, %v52
    %v54 = vrot.slane %v49, %v53
    %vm56 = vcmask 130048
    %v58 = vsel %vm56, %v46, 0
    %60 = vmatprep.subr.mxu0 0.0
    %61 = vmatpush1.msra.mxu0 0.0
    %62 = vmatprep.subr.mxu0 0.0
    %63 = vmatpush1.msra.mxu0 0.0
    %64 = vmatprep.subr.mxu0 0.0
    %65 = vmatpush1.msra.mxu0 0.0
    %66 = vmatprep.subr.mxu0 0.0
    %67 = vmatpush1.msra.mxu0 0.0
    %68 = vmatprep.subr.mxu0 0.0
    %69 = vmatpush1.msra.mxu0 0.0
    %70 = vmatprep.subr.mxu0 0.0
    %71 = vmatpush1.msra.mxu0 0.0
    %72 = vmatprep.subr.mxu0 0.0
    %73 = vmatpush1.msra.mxu0 0.0
    %74 = vmatprep.subr.mxu0 0.0
    %75 = vmatpush1.msra.mxu0 0.0
    %76 = vmatprep.subr.mxu0 0.0
    %77 = vmatpush1.msra.mxu0 0.0
    %78 = vmatprep.subr.mxu0 0.0
    %79 = vmatpush1.msra.mxu0 0.0
    %80 = vmatprep.subr.mxu0 0.0
    %81 = vmatpush1.msra.mxu0 0.0
    %82 = vmatprep.subr.mxu0 0.0
    %83 = vmatpush1.msra.mxu0 0.0
    %84 = vmatprep.subr.mxu0 0.0
    %85 = vmatpush1.msra.mxu0 0.0
    %86 = vmatprep.subr.mxu0 0.0
    %87 = vmatpush1.msra.mxu0 0.0
    %88 = vmatprep.subr.mxu0 0.0
    %89 = vmatpush1.msra.mxu0 %v48
    %90 = vmatprep.subr.mxu0 0.0
    %91 = vmatpush1.msra.mxu0 %v47
    %92 = vmatprep.subr.mxu0 0.0
    %93 = vmatpush2.msra.mxu0 0.0
    %94 = vmatprep.subr.mxu0 0.0
    %95 = vmatpush2.msra.mxu0 0.0
    %96 = vmatprep.subr.mxu0 0.0
    %97 = vmatpush2.msra.mxu0 0.0
    %98 = vmatprep.subr.mxu0 0.0
    %99 = vmatpush2.msra.mxu0 0.0
    %100 = vmatprep.subr.mxu0 0.0
    %101 = vmatpush2.msra.mxu0 0.0
    %102 = vmatprep.subr.mxu0 0.0
    %103 = vmatpush2.msra.mxu0 0.0
    %104 = vmatprep.subr.mxu0 0.0
    %105 = vmatpush2.msra.mxu0 0.0
    %106 = vmatprep.subr.mxu0 0.0
    %107 = vmatpush2.msra.mxu0 0.0
    %108 = vmatprep.subr.mxu0 0.0
    %109 = vmatpush2.msra.mxu0 0.0
    %110 = vmatprep.subr.mxu0 0.0
    %111 = vmatpush2.msra.mxu0 0.0
    %112 = vmatprep.subr.mxu0 0.0
    %113 = vmatpush2.msra.mxu0 0.0
    %114 = vmatprep.subr.mxu0 0.0
    %115 = vmatpush2.msra.mxu0 0.0
    %116 = vmatprep.subr.mxu0 0.0
    %117 = vmatpush2.msra.mxu0 0.0
    %118 = vmatprep.subr.mxu0 0.0
    %119 = vmatpush2.msra.mxu0 0.0
    %120 = vmatprep.subr.mxu0 0.0
    %121 = vmatpush2.msra.mxu0 0.0
    %122 = vmatprep.subr.mxu0 0.0
    %123 = vmatpush2.msra.mxu0 0.0
    %124 = vmatprep.mubr.f32.mxu0 0.0
    %125 = vmatmul.mubr.f32.gmra.mxu0 %v58
    %v126 = vpop.f32.mrf.mxu0
    %v127 = vadd.f32 %v54, %v126
    %v128 = vpop.f32.mrf.mxu0
    %129 = vdwg.mxu0
    %v130 = vmul.f32 %v127, 0.01
    %v131 = vmax.f32 %v127, %v130
    %v132 = vld [vmem:[%s3] sm:$0xff]
    %v133 = vld [vmem:[%s3 + $0x8] sm:$0xff]
    %v134 = vld [vmem:[%s3 + $0x10] sm:$0xff]
    %v135 = vld [vmem:[%s3 + $0x18] sm:$0xff]
    %v136 = vld [vmem:[%s3 + $0x20] sm:$0xff]
    %v137 = vld [vmem:[%s3 + $0x28] sm:$0xff]
    %v138 = vld [vmem:[%s3 + $0x30] sm:$0xff]
    %v139 = vld [vmem:[%s3 + $0x38] sm:$0xff]
    %v140 = vld [vmem:[%s3 + $0x40] sm:$0xff]
    %v141 = vld [vmem:[%s3 + $0x48] sm:$0xff]
    %v142 = vld [vmem:[%s3 + $0x50] sm:$0xff]
    %v143 = vld [vmem:[%s3 + $0x58] sm:$0xff]
    %v144 = vld [vmem:[%s3 + $0x60] sm:$0xff]
    %v145 = vld [vmem:[%s3 + $0x68] sm:$0xff]
    %v146 = vld [vmem:[%s3 + $0x70] sm:$0xff]
    %v147 = vld [vmem:[%s3 + $0x78] sm:$0xff]
    %v148 = vld [vmem:[%s4] sm:$0x1]
    %v150 = vlaneseq
    %v151 = vshrl.u32 %v150, 7
    %v152 = vsub.s32 0, %v151
    %v153 = vrot.slane %v148, %v152
    %155 = vmatprep.subr.mxu0 0.0
    %156 = vmatpush1.msra.mxu0 %v147
    %157 = vmatprep.subr.mxu0 0.0
    %158 = vmatpush1.msra.mxu0 %v146
    %159 = vmatprep.subr.mxu0 0.0
    %160 = vmatpush1.msra.mxu0 %v145
    %161 = vmatprep.subr.mxu0 0.0
    %162 = vmatpush1.msra.mxu0 %v144
    %163 = vmatprep.subr.mxu0 0.0
    %164 = vmatpush1.msra.mxu0 %v143
    %165 = vmatprep.subr.mxu0 0.0
    %166 = vmatpush1.msra.mxu0 %v142
    %167 = vmatprep.subr.mxu0 0.0
    %168 = vmatpush1.msra.mxu0 %v141
    %169 = vmatprep.subr.mxu0 0.0
    %170 = vmatpush1.msra.mxu0 %v140
    %171 = vmatprep.subr.mxu0 0.0
    %172 = vmatpush1.msra.mxu0 %v139
    %173 = vmatprep.subr.mxu0 0.0
    %174 = vmatpush1.msra.mxu0 %v138
    %175 = vmatprep.subr.mxu0 0.0
    %176 = vmatpush1.msra.mxu0 %v137
    %177 = vmatprep.subr.mxu0 0.0
    %178 = vmatpush1.msra.mxu0 %v136
    %179 = vmatprep.subr.mxu0 0.0
    %180 = vmatpush1.msra.mxu0 %v135
    %181 = vmatprep.subr.mxu0 0.0
    %182 = vmatpush1.msra.mxu0 %v134
    %183 = vmatprep.subr.mxu0 0.0
    %184 = vmatpush1.msra.mxu0 %v133
    %185 = vmatprep.subr.mxu0 0.0
    %186 = vmatpush1.msra.mxu0 %v132
    %187 = vmatprep.subr.mxu0 0.0
    %188 = vmatpush2.msra.mxu0 0.0
    %189 = vmatprep.subr.mxu0 0.0
    %190 = vmatpush2.msra.mxu0 0.0
    %191 = vmatprep.subr.mxu0 0.0
    %192 = vmatpush2.msra.mxu0 0.0
    %193 = vmatprep.subr.mxu0 0.0
    %194 = vmatpush2.msra.mxu0 0.0
    %195 = vmatprep.subr.mxu0 0.0
    %196 = vmatpush2.msra.mxu0 0.0
    %197 = vmatprep.subr.mxu0 0.0
    %198 = vmatpush2.msra.mxu0 0.0
    %199 = vmatprep.subr.mxu0 0.0
    %200 = vmatpush2.msra.mxu0 0.0
    %201 = vmatprep.subr.mxu0 0.0
    %202 = vmatpush2.msra.mxu0 0.0
    %203 = vmatprep.subr.mxu0 0.0
    %204 = vmatpush2.msra.mxu0 0.0
    %205 = vmatprep.subr.mxu0 0.0
    %206 = vmatpush2.msra.mxu0 0.0
    %207 = vmatprep.subr.mxu0 0.0
    %208 = vmatpush2.msra.mxu0 0.0
    %209 = vmatprep.subr.mxu0 0.0
    %210 = vmatpush2.msra.mxu0 0.0
    %211 = vmatprep.subr.mxu0 0.0
    %212 = vmatpush2.msra.mxu0 0.0
    %213 = vmatprep.subr.mxu0 0.0
    %214 = vmatpush2.msra.mxu0 0.0
    %215 = vmatprep.subr.mxu0 0.0
    %216 = vmatpush2.msra.mxu0 0.0
    %217 = vmatprep.subr.mxu0 0.0
    %218 = vmatpush2.msra.mxu0 0.0
    %219 = vmatprep.mubr.f32.mxu0 0.0
    %220 = vmatmul.mubr.f32.gmra.mxu0 %v131
    %v221 = vpop.f32.mrf.mxu0
    %v222 = vadd.f32 %v153, %v221
    %v223 = vpop.f32.mrf.mxu0
    %224 = vdwg.mxu0
    %v225 = vmul.f32 %v222, 0.01
    %v226 = vmax.f32 %v222, %v225
    %v227 = vld [vmem:[#allocation2] sm:$0xff]
    %v228 = vld [vmem:[#allocation2 + $0x8] sm:$0xff]
    %v229 = vld [vmem:[#allocation2 + $0x10] sm:$0xff]
    %v230 = vld [vmem:[#allocation2 + $0x18] sm:$0xff]
    %v231 = vld [vmem:[#allocation2 + $0x20] sm:$0xff]
    %v232 = vld [vmem:[#allocation2 + $0x28] sm:$0xff]
    %v233 = vld [vmem:[#allocation2 + $0x30] sm:$0xff]
    %v234 = vld [vmem:[#allocation2 + $0x38] sm:$0xff]
    %v235 = vld [vmem:[#allocation2 + $0x40] sm:$0xff]
    %v236 = vld [vmem:[#allocation2 + $0x48] sm:$0xff]
    %v237 = vld [vmem:[#allocation2 + $0x50] sm:$0xff]
    %v238 = vld [vmem:[#allocation2 + $0x58] sm:$0xff]
    %v239 = vld [vmem:[#allocation2 + $0x60] sm:$0xff]
    %v240 = vld [vmem:[#allocation2 + $0x68] sm:$0xff]
    %v241 = vld [vmem:[#allocation2 + $0x70] sm:$0xff]
    %v242 = vld [vmem:[#allocation2 + $0x78] sm:$0xff]
    %v243 = vld [vmem:[%s6] sm:$0x1]
    %v245 = vlaneseq
    %v246 = vshrl.u32 %v245, 7
    %v247 = vsub.s32 0, %v246
    %v248 = vrot.slane %v243, %v247
    %250 = vmatprep.subr.mxu0 0.0
    %251 = vmatpush1.msra.mxu0 %v242
    %252 = vmatprep.subr.mxu0 0.0
    %253 = vmatpush1.msra.mxu0 %v241
    %254 = vmatprep.subr.mxu0 0.0
    %255 = vmatpush1.msra.mxu0 %v240
    %256 = vmatprep.subr.mxu0 0.0
    %257 = vmatpush1.msra.mxu0 %v239
    %258 = vmatprep.subr.mxu0 0.0
    %259 = vmatpush1.msra.mxu0 %v238
    %260 = vmatprep.subr.mxu0 0.0
    %261 = vmatpush1.msra.mxu0 %v237
    %262 = vmatprep.subr.mxu0 0.0
    %263 = vmatpush1.msra.mxu0 %v236
    %264 = vmatprep.subr.mxu0 0.0
    %265 = vmatpush1.msra.mxu0 %v235
    %266 = vmatprep.subr.mxu0 0.0
    %267 = vmatpush1.msra.mxu0 %v234
    %268 = vmatprep.subr.mxu0 0.0
    %269 = vmatpush1.msra.mxu0 %v233
    %270 = vmatprep.subr.mxu0 0.0
    %271 = vmatpush1.msra.mxu0 %v232
    %272 = vmatprep.subr.mxu0 0.0
    %273 = vmatpush1.msra.mxu0 %v231
    %274 = vmatprep.subr.mxu0 0.0
    %275 = vmatpush1.msra.mxu0 %v230
    %276 = vmatprep.subr.mxu0 0.0
    %277 = vmatpush1.msra.mxu0 %v229
    %278 = vmatprep.subr.mxu0 0.0
    %279 = vmatpush1.msra.mxu0 %v228
    %280 = vmatprep.subr.mxu0 0.0
    %281 = vmatpush1.msra.mxu0 %v227
    %282 = vmatprep.subr.mxu0 0.0
    %283 = vmatpush2.msra.mxu0 0.0
    %284 = vmatprep.subr.mxu0 0.0
    %285 = vmatpush2.msra.mxu0 0.0
    %286 = vmatprep.subr.mxu0 0.0
    %287 = vmatpush2.msra.mxu0 0.0
    %288 = vmatprep.subr.mxu0 0.0
    %289 = vmatpush2.msra.mxu0 0.0
    %290 = vmatprep.subr.mxu0 0.0
    %291 = vmatpush2.msra.mxu0 0.0
    %292 = vmatprep.subr.mxu0 0.0
    %293 = vmatpush2.msra.mxu0 0.0
    %294 = vmatprep.subr.mxu0 0.0
    %295 = vmatpush2.msra.mxu0 0.0
    %296 = vmatprep.subr.mxu0 0.0
    %297 = vmatpush2.msra.mxu0 0.0
    %298 = vmatprep.subr.mxu0 0.0
    %299 = vmatpush2.msra.mxu0 0.0
    %300 = vmatprep.subr.mxu0 0.0
    %301 = vmatpush2.msra.mxu0 0.0
    %302 = vmatprep.subr.mxu0 0.0
    %303 = vmatpush2.msra.mxu0 0.0
    %304 = vmatprep.subr.mxu0 0.0
    %305 = vmatpush2.msra.mxu0 0.0
    %306 = vmatprep.subr.mxu0 0.0
    %307 = vmatpush2.msra.mxu0 0.0
    %308 = vmatprep.subr.mxu0 0.0
    %309 = vmatpush2.msra.mxu0 0.0
    %310 = vmatprep.subr.mxu0 0.0
    %311 = vmatpush2.msra.mxu0 0.0
    %312 = vmatprep.subr.mxu0 0.0
    %313 = vmatpush2.msra.mxu0 0.0
    %314 = vmatprep.mubr.f32.mxu0 0.0
    %315 = vmatmul.mubr.f32.gmra.mxu0 %v226
    %v316 = vpop.f32.mrf.mxu0
    %v317 = vadd.f32 %v248, %v316
    %v318 = vpop.f32.mrf.mxu0
    %319 = vdwg.mxu0
    %v320 = vmul.f32 %v317, 0.01
    %v321 = vmax.f32 %v317, %v320
    %v322 = vld [vmem:[%s7] sm:$0xff]
    %v323 = vld [vmem:[%s7 + $0x8] sm:$0xff]
    %v324 = vld [vmem:[%s7 + $0x10] sm:$0xff]
    %v325 = vld [vmem:[%s7 + $0x18] sm:$0xff]
    %v326 = vld [vmem:[%s7 + $0x20] sm:$0xff]
    %v327 = vld [vmem:[%s7 + $0x28] sm:$0xff]
    %v328 = vld [vmem:[%s7 + $0x30] sm:$0xff]
    %v329 = vld [vmem:[%s7 + $0x38] sm:$0xff]
    %v330 = vld [vmem:[%s7 + $0x40] sm:$0xff]
    %v331 = vld [vmem:[%s7 + $0x48] sm:$0xff]
    %v332 = vld [vmem:[%s7 + $0x50] sm:$0xff]
    %v333 = vld [vmem:[%s7 + $0x58] sm:$0xff]
    %v334 = vld [vmem:[%s7 + $0x60] sm:$0xff]
    %v335 = vld [vmem:[%s7 + $0x68] sm:$0xff]
    %v336 = vld [vmem:[%s7 + $0x70] sm:$0xff]
    %v337 = vld [vmem:[%s7 + $0x78] sm:$0xff]
    %v338 = vld [vmem:[%s8] sm:$0x1]
    %v340 = vlaneseq
    %v341 = vshrl.u32 %v340, 7
    %v342 = vsub.s32 0, %v341
    %v343 = vrot.slane %v338, %v342
    %345 = vmatprep.subr.mxu0 0.0
    %346 = vmatpush1.msra.mxu0 %v337
    %347 = vmatprep.subr.mxu0 0.0
    %348 = vmatpush1.msra.mxu0 %v336
    %349 = vmatprep.subr.mxu0 0.0
    %350 = vmatpush1.msra.mxu0 %v335
    %351 = vmatprep.subr.mxu0 0.0
    %352 = vmatpush1.msra.mxu0 %v334
    %353 = vmatprep.subr.mxu0 0.0
    %354 = vmatpush1.msra.mxu0 %v333
    %355 = vmatprep.subr.mxu0 0.0
    %356 = vmatpush1.msra.mxu0 %v332
    %357 = vmatprep.subr.mxu0 0.0
    %358 = vmatpush1.msra.mxu0 %v331
    %359 = vmatprep.subr.mxu0 0.0
    %360 = vmatpush1.msra.mxu0 %v330
    %361 = vmatprep.subr.mxu0 0.0
    %362 = vmatpush1.msra.mxu0 %v329
    %363 = vmatprep.subr.mxu0 0.0
    %364 = vmatpush1.msra.mxu0 %v328
    %365 = vmatprep.subr.mxu0 0.0
    %366 = vmatpush1.msra.mxu0 %v327
    %367 = vmatprep.subr.mxu0 0.0
    %368 = vmatpush1.msra.mxu0 %v326
    %369 = vmatprep.subr.mxu0 0.0
    %370 = vmatpush1.msra.mxu0 %v325
    %371 = vmatprep.subr.mxu0 0.0
    %372 = vmatpush1.msra.mxu0 %v324
    %373 = vmatprep.subr.mxu0 0.0
    %374 = vmatpush1.msra.mxu0 %v323
    %375 = vmatprep.subr.mxu0 0.0
    %376 = vmatpush1.msra.mxu0 %v322
    %377 = vmatprep.subr.mxu0 0.0
    %378 = vmatpush2.msra.mxu0 0.0
    %379 = vmatprep.subr.mxu0 0.0
    %380 = vmatpush2.msra.mxu0 0.0
    %381 = vmatprep.subr.mxu0 0.0
    %382 = vmatpush2.msra.mxu0 0.0
    %383 = vmatprep.subr.mxu0 0.0
    %384 = vmatpush2.msra.mxu0 0.0
    %385 = vmatprep.subr.mxu0 0.0
    %386 = vmatpush2.msra.mxu0 0.0
    %387 = vmatprep.subr.mxu0 0.0
    %388 = vmatpush2.msra.mxu0 0.0
    %389 = vmatprep.subr.mxu0 0.0
    %390 = vmatpush2.msra.mxu0 0.0
    %391 = vmatprep.subr.mxu0 0.0
    %392 = vmatpush2.msra.mxu0 0.0
    %393 = vmatprep.subr.mxu0 0.0
    %394 = vmatpush2.msra.mxu0 0.0
    %395 = vmatprep.subr.mxu0 0.0
    %396 = vmatpush2.msra.mxu0 0.0
    %397 = vmatprep.subr.mxu0 0.0
    %398 = vmatpush2.msra.mxu0 0.0
    %399 = vmatprep.subr.mxu0 0.0
    %400 = vmatpush2.msra.mxu0 0.0
    %401 = vmatprep.subr.mxu0 0.0
    %402 = vmatpush2.msra.mxu0 0.0
    %403 = vmatprep.subr.mxu0 0.0
    %404 = vmatpush2.msra.mxu0 0.0
    %405 = vmatprep.subr.mxu0 0.0
    %406 = vmatpush2.msra.mxu0 0.0
    %407 = vmatprep.subr.mxu0 0.0
    %408 = vmatpush2.msra.mxu0 0.0
    %409 = vmatprep.mubr.f32.mxu0 0.0
    %410 = vmatmul.mubr.f32.gmra.mxu0 %v321
    %v411 = vpop.f32.mrf.mxu0
    %v412 = vadd.f32 %v343, %v411
    %v413 = vpop.f32.mrf.mxu0
    %414 = vdwg.mxu0
    %vm415 = vcmask 31744
    %416 = vst.msk [vmem:[%s9] sm:$0xff] %vm415, %v412
    // Predicated region
    $region42: #{_qnetwork_forward_jit.1} parent=1 // pred_check
      _
    $region43: #{_qnetwork_forward_jit.1} parent=1 // pred_check_branch
      %418 = sbr.rel (0) target = $region45
    $region44: #{_qnetwork_forward_jit.1} parent=1 // pred_region
      _
    $region45: #{_qnetwork_forward_jit.1} parent=1 // pred_fallthru
      _
    // Predicated region
    $region46: #{_qnetwork_forward_jit.1} parent=1 // pred_check
      _
    $region47: #{_qnetwork_forward_jit.1} parent=1 // pred_check_branch
      %420 = sbr.rel (0) target = $region49
    $region48: #{_qnetwork_forward_jit.1} parent=1 // pred_region
      _
    $region49: #{_qnetwork_forward_jit.1} parent=1 // pred_fallthru
      _
    %421 = vsyncpa [#allocation3], 1

</llo_original>
